<compile_context>
chip_gen: v6e
topology: v6e:2x2x1
jax: 0.10.0
libtpu: 0.0.40
codegen_flags: <defaults>
</compile_context>

<pallas_src>
import functools

import jax
import jax.numpy as jnp
from jax.experimental import pallas as pl
from jax.experimental.pallas import tpu as pltpu

LANE = 128


def _round_up(x, m):
    return (x + m - 1) // m * m


def _decoder_step_kernel(idx_ref, h_ref, emb_ref, wi_ref, wh_ref, bbig_ref,
                         wout_ref, bout_ref, logp_ref, hnew_ref, *, hp):
    B = idx_ref.shape[0]
    Vp = emb_ref.shape[0]

    # 1) Embedding gather fused in-kernel as a one-hot matmul on the MXU.
    iota = jax.lax.broadcasted_iota(jnp.int32, (B, Vp), 1)            # [B, Vp]
    onehot = jnp.where(iota == idx_ref[...], 1.0, 0.0).astype(jnp.float32)
    emb = jnp.dot(onehot, emb_ref[...], preferred_element_type=jnp.float32)   # [B, E]

    # 2) Dropout (eval mode) = identity; ReLU on the embedded step.
    x = jnp.maximum(emb, 0.0)                                          # [B, E]
    h = h_ref[...]                                                     # [B, H]

    # 3) Packed gate projection: five lane-aligned 128-wide column blocks
    #    [ r_pre | z_pre | i_n | h_n | h passthrough (padded to hp lanes) ].
    g = (jnp.dot(x, wi_ref[...], preferred_element_type=jnp.float32)
         + jnp.dot(h, wh_ref[...], preferred_element_type=jnp.float32)
         + bbig_ref[...])                                              # [B, 5*hp]

    r = jax.nn.sigmoid(g[:, 0 * hp:1 * hp])
    z = jax.nn.sigmoid(g[:, 1 * hp:2 * hp])
    n = jnp.tanh(g[:, 2 * hp:3 * hp] + r * g[:, 3 * hp:4 * hp])        # PyTorch n-gate semantics
    h_pad = g[:, 4 * hp:5 * hp]                                        # prev hidden, 128-lane padded
    h_new = (1.0 - z) * n + z * h_pad                                  # padded lanes stay exactly 0
    hnew_ref[...] = h_new                                              # lane-dense store [B, hp]

    # 4) Output projection + stable log_softmax. Padded vocab columns carry a -1e30 bias,
    #    so they never influence the max or the logsumexp.
    logits = jnp.dot(h_new, wout_ref[...], preferred_element_type=jnp.float32) + bout_ref[...]
    m = jnp.max(logits, axis=-1, keepdims=True)
    shifted = logits - m
    lse = jnp.log(jnp.sum(jnp.exp(shifted), axis=-1, keepdims=True))
    logp_ref[...] = shifted - lse                                      # lane-dense store [B, Op]


def pack_params(raw, lane=LANE):
    """One-time offline packing of PyTorch-layout weights into lane-aligned kernel tensors."""
    emb = jnp.asarray(raw["embedding"], jnp.float32)          # [vocab, E]
    w_ih = jnp.asarray(raw["w_ih"], jnp.float32)              # [3H, E]  (gate order r, z, n)
    w_hh = jnp.asarray(raw["w_hh"], jnp.float32)              # [3H, H]
    b_ih = jnp.asarray(raw["b_ih"], jnp.float32)              # [3H]
    b_hh = jnp.asarray(raw["b_hh"], jnp.float32)              # [3H]
    w_out = jnp.asarray(raw["w_out"], jnp.float32)            # [OUT, H]
    b_out = jnp.asarray(raw["b_out"], jnp.float32)            # [OUT]

    vocab, E = emb.shape
    H = w_hh.shape[1]
    OUT = w_out.shape[0]
    Vp = _round_up(vocab, lane)
    Hp = _round_up(H, lane)
    Op = _round_up(OUT, lane)

    emb_pad = jnp.zeros((Vp, E), jnp.float32).at[:vocab].set(emb)

    def blk(w):  # [H, in] -> transposed, lane-padded [in, Hp] block
        return jnp.zeros((w.shape[1], Hp), jnp.float32).at[:, :H].set(w.T)

    zeros_i = jnp.zeros((E, Hp), jnp.float32)
    zeros_h = jnp.zeros((H, Hp), jnp.float32)
    eye_h = jnp.zeros((H, Hp), jnp.float32).at[:, :H].set(jnp.eye(H, dtype=jnp.float32))

    w_ir, w_iz, w_in = w_ih[:H], w_ih[H:2 * H], w_ih[2 * H:]
    w_hr, w_hz, w_hn = w_hh[:H], w_hh[H:2 * H], w_hh[2 * H:]

    # Column blocks (each Hp lanes): [r, z, i_n, h_n, h passthrough].
    w_i_big = jnp.concatenate([blk(w_ir), blk(w_iz), blk(w_in), zeros_i, zeros_i], axis=1)
    w_h_big = jnp.concatenate([blk(w_hr), blk(w_hz), zeros_h, blk(w_hn), eye_h], axis=1)

    def bias_blk(b=None):
        out = jnp.zeros((Hp,), jnp.float32)
        return out if b is None else out.at[:H].set(b)

    b_big = jnp.concatenate([
        bias_blk(b_ih[:H] + b_hh[:H]),             # r : biases pre-summed offline
        bias_blk(b_ih[H:2 * H] + b_hh[H:2 * H]),   # z : biases pre-summed offline
        bias_blk(b_ih[2 * H:]),                    # i_n
        bias_blk(b_hh[2 * H:]),                    # h_n (kept separate: n = tanh(i_n + r*h_n))
        bias_blk(),                                # h passthrough
    ])[None, :]                                    # [1, 5*Hp]

    w_out_pad = jnp.zeros((Hp, Op), jnp.float32).at[:H, :OUT].set(w_out.T)
    b_out_pad = jnp.full((1, Op), -1e30, jnp.float32).at[0, :OUT].set(b_out)

    return {
        "emb_pad": emb_pad, "w_i_big": w_i_big, "w_h_big": w_h_big, "b_big": b_big,
        "w_out_pad": w_out_pad, "b_out_pad": b_out_pad,
        "hidden_size": H, "output_size": OUT, "hp": Hp,
    }


def decoder_rnn_forward(input_step, last_hidden, packed):
    """input_step: int [B]; last_hidden: [1, B, H]. Returns (log_probs [B, OUT], hidden [1, B, H])."""
    B = input_step.shape[0]
    H = packed["hidden_size"]
    OUT = packed["output_size"]
    Hp = packed["hp"]
    Op = packed["b_out_pad"].shape[1]

    idx = input_step.reshape(B, 1).astype(jnp.int32)
    h_prev = last_hidden[0].astype(jnp.float32)                        # [B, H]

    vmem = pl.BlockSpec(memory_space=pltpu.MemorySpace.VMEM)
    kernel = functools.partial(_decoder_step_kernel, hp=Hp)

    ins = (idx, h_prev, packed["emb_pad"], packed["w_i_big"], packed["w_h_big"],
           packed["b_big"], packed["w_out_pad"], packed["b_out_pad"])

    Vp, E = packed["emb_pad"].shape
    flops = 2 * B * (Vp * E + E * 5 * Hp + H * 5 * Hp + Hp * Op)
    bytes_accessed = 4 * (sum(int(a.size) for a in ins) + B * (Hp + Op))
    cost = pl.CostEstimate(flops=flops, transcendentals=4 * B * Hp,
                           bytes_accessed=bytes_accessed)

    logp_pad, h_new_pad = pl.pallas_call(
        kernel,
        out_shape=(
            jax.ShapeDtypeStruct((B, Op), jnp.float32),   # lane-dense (128-multiple) store
            jax.ShapeDtypeStruct((B, Hp), jnp.float32),   # lane-dense (128-multiple) store
        ),
        in_specs=[vmem] * len(ins),
        out_specs=(vmem, vmem),
        cost_estimate=cost,
    )(*ins)

    log_probs = logp_pad[:, :OUT]
    hidden = h_new_pad[:, :H][None]                        # back to [nlayers=1, B, H]
    return log_probs, hidden


def _reference_forward(input_step, last_hidden, raw):
    """Pure-JAX reference mirroring the PyTorch forward (eval mode), using raw PyTorch-layout params."""
    emb = jnp.take(raw["embedding"], input_step, axis=0)
    x = jnp.maximum(emb, 0.0)
    h = last_hidden[0]
    H = raw["w_hh"].shape[1]
    gi = x @ raw["w_ih"].T + raw["b_ih"]
    gh = h @ raw["w_hh"].T + raw["b_hh"]
    r = jax.nn.sigmoid(gi[:, :H] + gh[:, :H])
    z = jax.nn.sigmoid(gi[:, H:2 * H] + gh[:, H:2 * H])
    n = jnp.tanh(gi[:, 2 * H:] + r * gh[:, 2 * H:])
    h_new = (1.0 - z) * n + z * h
    logits = h_new @ raw["w_out"].T + raw["b_out"]
    return jax.nn.log_softmax(logits, axis=1), h_new[None]


def _init_raw_params(key, vocab_size, embedding_dim, hidden_size, output_size):
    """Deterministic synthetic params with PyTorch-like shapes (GRU gate order r, z, n)."""
    ks = jax.random.split(key, 7)
    bound = 1.0 / jnp.sqrt(hidden_size)
    return {
        "embedding": jax.random.normal(ks[0], (vocab_size, embedding_dim), jnp.float32),
        "w_ih": jax.random.uniform(ks[1], (3 * hidden_size, embedding_dim), jnp.float32, -bound, bound),
        "w_hh": jax.random.uniform(ks[2], (3 * hidden_size, hidden_size), jnp.float32, -bound, bound),
        "b_ih": jax.random.uniform(ks[3], (3 * hidden_size,), jnp.float32, -bound, bound),
        "b_hh": jax.random.uniform(ks[4], (3 * hidden_size,), jnp.float32, -bound, bound),
        "w_out": jax.random.uniform(ks[5], (output_size, hidden_size), jnp.float32, -bound, bound),
        "b_out": jax.random.uniform(ks[6], (output_size,), jnp.float32, -bound, bound),
    }


if __name__ == "__main__":
    key = jax.random.PRNGKey(0)
    B, E, H, VOCAB, OUT = 8, 32, 32, 50, 64   # batch, embed dim, hidden, vocab, output_size

    k_params, k_step, k_hid = jax.random.split(key, 3)
    raw = _init_raw_params(k_params, VOCAB, E, H, OUT)
    packed = pack_params(raw)
    input_step = jax.random.randint(k_step, (B,), 0, VOCAB, dtype=jnp.int32)   # [B]
    last_hidden = jax.random.normal(k_hid, (1, B, H), jnp.float32)             # [nlayers=1, B, H]

    log_probs, hidden = decoder_rnn_forward(input_step, last_hidden, packed)
    jax.block_until_ready((log_probs, hidden))

    ref_lp, ref_h = _reference_forward(input_step, last_hidden, raw)
    assert log_probs.shape == (B, OUT) and hidden.shape == (1, B, H)
    assert jnp.allclose(log_probs, ref_lp, atol=1e-5, rtol=1e-5)
    assert jnp.allclose(hidden, ref_h, atol=1e-5, rtol=1e-5)

    print("KERNEL_OK")
</pallas_src>

<mosaic_0001>
module attributes {stable_mosaic.version = 11 : i64} {
  func.func @_decoder_step_kernel(%arg0: memref<8x1xi32, #tpu.memory_space<vmem>>, %arg1: memref<8x32xf32, #tpu.memory_space<vmem>>, %arg2: memref<128x32xf32, #tpu.memory_space<vmem>>, %arg3: memref<32x640xf32, #tpu.memory_space<vmem>>, %arg4: memref<32x640xf32, #tpu.memory_space<vmem>>, %arg5: memref<1x640xf32, #tpu.memory_space<vmem>>, %arg6: memref<128x128xf32, #tpu.memory_space<vmem>>, %arg7: memref<1x128xf32, #tpu.memory_space<vmem>>, %arg8: memref<8x128xf32, #tpu.memory_space<vmem>>, %arg9: memref<8x128xf32, #tpu.memory_space<vmem>>) attributes {dimension_semantics = [], scalar_prefetch = 0 : i64, scratch_operands = 0 : i64, tpu.core_type = #tpu.core_type<tc>} {
    %0 = tpu.iota {dimensions = array<i32: 1>} : vector<8x128xi32>
    %c0 = arith.constant 0 : index
    %c0_0 = arith.constant 0 : index
    %1 = vector.load %arg0[%c0, %c0_0] : memref<8x1xi32, #tpu.memory_space<vmem>>, vector<8x1xi32>
    %2 = vector.broadcast %1 : vector<8x1xi32> to vector<8x128xi32>
    %3 = arith.cmpi eq, %0, %2 : vector<8x128xi32>
    %cst = arith.constant 1.000000e+00 : f32
    %cst_1 = arith.constant 0.000000e+00 : f32
    %4 = vector.broadcast %cst : f32 to vector<8x128xf32>
    %5 = vector.broadcast %cst_1 : f32 to vector<8x128xf32>
    %6 = arith.select %3, %4, %5 : vector<8x128xi1>, vector<8x128xf32>
    %c0_2 = arith.constant 0 : index
    %c0_3 = arith.constant 0 : index
    %7 = vector.load %arg2[%c0_2, %c0_3] : memref<128x32xf32, #tpu.memory_space<vmem>>, vector<128x32xf32>
    %cst_4 = arith.constant dense<0.000000e+00> : vector<8x32xf32>
    %8 = tpu.matmul %6, %7, %cst_4 {dimension_numbers = #tpu.dot_dimension_numbers<[1], [0], [0], [1], [0, 0, 1, 1], [], []>} : vector<8x128xf32>, vector<128x32xf32>, vector<8x32xf32> -> vector<8x32xf32>
    %cst_5 = arith.constant 0.000000e+00 : f32
    %9 = vector.broadcast %cst_5 : f32 to vector<8x32xf32>
    %10 = arith.maximumf %8, %9 : vector<8x32xf32>
    %c0_6 = arith.constant 0 : index
    %c0_7 = arith.constant 0 : index
    %11 = vector.load %arg1[%c0_6, %c0_7] : memref<8x32xf32, #tpu.memory_space<vmem>>, vector<8x32xf32>
    %c0_8 = arith.constant 0 : index
    %c0_9 = arith.constant 0 : index
    %12 = vector.load %arg3[%c0_8, %c0_9] : memref<32x640xf32, #tpu.memory_space<vmem>>, vector<32x640xf32>
    %cst_10 = arith.constant dense<0.000000e+00> : vector<8x640xf32>
    %13 = tpu.matmul %10, %12, %cst_10 {dimension_numbers = #tpu.dot_dimension_numbers<[1], [0], [0], [1], [0, 0, 1, 1], [], []>} : vector<8x32xf32>, vector<32x640xf32>, vector<8x640xf32> -> vector<8x640xf32>
    %c0_11 = arith.constant 0 : index
    %c0_12 = arith.constant 0 : index
    %14 = vector.load %arg4[%c0_11, %c0_12] : memref<32x640xf32, #tpu.memory_space<vmem>>, vector<32x640xf32>
    %cst_13 = arith.constant dense<0.000000e+00> : vector<8x640xf32>
    %15 = tpu.matmul %11, %14, %cst_13 {dimension_numbers = #tpu.dot_dimension_numbers<[1], [0], [0], [1], [0, 0, 1, 1], [], []>} : vector<8x32xf32>, vector<32x640xf32>, vector<8x640xf32> -> vector<8x640xf32>
    %16 = arith.addf %13, %15 : vector<8x640xf32>
    %c0_14 = arith.constant 0 : index
    %c0_15 = arith.constant 0 : index
    %17 = vector.load %arg5[%c0_14, %c0_15] : memref<1x640xf32, #tpu.memory_space<vmem>>, vector<1x640xf32>
    %18 = vector.broadcast %17 : vector<1x640xf32> to vector<8x640xf32>
    %19 = arith.addf %16, %18 : vector<8x640xf32>
    %20 = vector.extract_strided_slice %19 {offsets = [0, 0], sizes = [8, 128], strides = [1, 1]} : vector<8x640xf32> to vector<8x128xf32>
    %21 = arith.negf %20 : vector<8x128xf32>
    %22 = math.exp %21 : vector<8x128xf32>
    %cst_16 = arith.constant 1.000000e+00 : f32
    %23 = vector.broadcast %cst_16 : f32 to vector<8x128xf32>
    %24 = arith.addf %23, %22 : vector<8x128xf32>
    %25 = arith.divf %23, %24 : vector<8x128xf32>
    %26 = vector.extract_strided_slice %19 {offsets = [0, 128], sizes = [8, 128], strides = [1, 1]} : vector<8x640xf32> to vector<8x128xf32>
    %27 = arith.negf %26 : vector<8x128xf32>
    %28 = math.exp %27 : vector<8x128xf32>
    %cst_17 = arith.constant 1.000000e+00 : f32
    %29 = vector.broadcast %cst_17 : f32 to vector<8x128xf32>
    %30 = arith.addf %29, %28 : vector<8x128xf32>
    %31 = arith.divf %29, %30 : vector<8x128xf32>
    %32 = vector.extract_strided_slice %19 {offsets = [0, 256], sizes = [8, 128], strides = [1, 1]} : vector<8x640xf32> to vector<8x128xf32>
    %33 = vector.extract_strided_slice %19 {offsets = [0, 384], sizes = [8, 128], strides = [1, 1]} : vector<8x640xf32> to vector<8x128xf32>
    %34 = arith.mulf %25, %33 : vector<8x128xf32>
    %35 = arith.addf %32, %34 : vector<8x128xf32>
    %36 = math.tanh %35 : vector<8x128xf32>
    %37 = vector.extract_strided_slice %19 {offsets = [0, 512], sizes = [8, 128], strides = [1, 1]} : vector<8x640xf32> to vector<8x128xf32>
    %cst_18 = arith.constant 1.000000e+00 : f32
    %38 = vector.broadcast %cst_18 : f32 to vector<8x128xf32>
    %39 = arith.subf %38, %31 : vector<8x128xf32>
    %40 = arith.mulf %39, %36 : vector<8x128xf32>
    %41 = arith.mulf %31, %37 : vector<8x128xf32>
    %42 = arith.addf %40, %41 : vector<8x128xf32>
    %c0_19 = arith.constant 0 : index
    %c0_20 = arith.constant 0 : index
    %43 = vector.load %arg9[%c0_19, %c0_20] : memref<8x128xf32, #tpu.memory_space<vmem>>, vector<8x128xf32>
    tpu.vector_store %arg9[%c0_19, %c0_20], %42 {strides = array<i32>} : memref<8x128xf32, #tpu.memory_space<vmem>>, vector<8x128xf32>,
    %c0_21 = arith.constant 0 : index
    %c0_22 = arith.constant 0 : index
    %44 = vector.load %arg6[%c0_21, %c0_22] : memref<128x128xf32, #tpu.memory_space<vmem>>, vector<128x128xf32>
    %cst_23 = arith.constant dense<0.000000e+00> : vector<8x128xf32>
    %45 = tpu.matmul %42, %44, %cst_23 {dimension_numbers = #tpu.dot_dimension_numbers<[1], [0], [0], [1], [0, 0, 1, 1], [], []>} : vector<8x128xf32>, vector<128x128xf32>, vector<8x128xf32> -> vector<8x128xf32>
    %c0_24 = arith.constant 0 : index
    %c0_25 = arith.constant 0 : index
    %46 = vector.load %arg7[%c0_24, %c0_25] : memref<1x128xf32, #tpu.memory_space<vmem>>, vector<1x128xf32>
    %47 = vector.broadcast %46 : vector<1x128xf32> to vector<8x128xf32>
    %48 = arith.addf %45, %47 : vector<8x128xf32>
    %cst_26 = arith.constant dense<0xFF800000> : vector<8xf32>
    %49 = vector.multi_reduction <maximumf>, %48, %cst_26 [1] : vector<8x128xf32> to vector<8xf32>
    %50 = vector.shape_cast %49 : vector<8xf32> to vector<8x1xf32>
    %51 = vector.broadcast %50 : vector<8x1xf32> to vector<8x128xf32>
    %52 = arith.subf %48, %51 : vector<8x128xf32>
    %53 = math.exp %52 : vector<8x128xf32>
    %cst_27 = arith.constant dense<0.000000e+00> : vector<8xf32>
    %54 = vector.multi_reduction <add>, %53, %cst_27 [1] : vector<8x128xf32> to vector<8xf32>
    %55 = vector.shape_cast %54 : vector<8xf32> to vector<8x1xf32>
    %56 = math.log %55 : vector<8x1xf32>
    %57 = vector.broadcast %56 : vector<8x1xf32> to vector<8x128xf32>
    %58 = arith.subf %52, %57 : vector<8x128xf32>
    %c0_28 = arith.constant 0 : index
    %c0_29 = arith.constant 0 : index
    %59 = vector.load %arg8[%c0_28, %c0_29] : memref<8x128xf32, #tpu.memory_space<vmem>>, vector<8x128xf32>
    tpu.vector_store %arg8[%c0_28, %c0_29], %58 {strides = array<i32>} : memref<8x128xf32, #tpu.memory_space<vmem>>, vector<8x128xf32>,
    return
  }
}

</mosaic_0001>

<llo_original>
// kernel: tpu_custom_call.1
$region0: #{tpu_custom_call.1}
  #allocation0 [shape = 'u32[]', space=smem, size = 0x4, offset = 0x4, fixed_abs, tag = 'smem constant byte address 0x4 - core index']
  #allocation1 [shape = 'u32[144,128]{1,0:T(1,128)}', space=vmem, size = 0x12000, scoped, tag = 'internal scratch']
  %s0 = inlined_call_operand.vmem [shape: s32[8,1], index: 0, kind: input, shape index: {}]
  %s1 = inlined_call_operand.vmem [shape: f32[8,32], index: 1, kind: input, shape index: {}]
  %s2 = inlined_call_operand.vmem [shape: f32[128,32], index: 2, kind: input, shape index: {}]
  %s3 = inlined_call_operand.vmem [shape: f32[32,640], index: 3, kind: input, shape index: {}]
  %s4 = inlined_call_operand.hbm [shape: f32[32,640], index: 4, kind: input, shape index: {}]
  %s5 = inlined_call_operand.vmem [shape: f32[1,640], index: 5, kind: input, shape index: {}]
  %s6 = inlined_call_operand.hbm [shape: f32[128,128], index: 6, kind: input, shape index: {}]
  %s7 = inlined_call_operand.vmem [shape: f32[1,128], index: 7, kind: input, shape index: {}]
  %s8 = inlined_call_operand.hbm [shape: f32[8,128], index: 8, kind: output, shape index: {0}]
  %s9 = inlined_call_operand.hbm [shape: f32[8,128], index: 9, kind: output, shape index: {1}]
  %10 = xla_tuple %s8, %s9
  %s11 = sld [smem:[#allocation0]]
  $region58: #{tpu_custom_call.1} parent=0
    _
  %s13 = ssub.s32 1, %s11
  %s14 = scalar_select 0, %s13, %s11
  $region1: #{tpu_custom_call.1} parent=0
    #allocation2 [shape = 'u8[81920]{0}', space=vmem, size = 0x14000, scoped, tag = 'input window, operand 4, single buffered']
    #allocation3 [shape = 's32[1]{0}', space=sflag, size = 0x4, scoped, tag = 'scoped memory for tpu_custom_call.1']
    #allocation4 [shape = 's32[1]{0}', space=sflag, size = 0x4, scoped, tag = 'scoped memory for tpu_custom_call.1']
    #allocation5 [shape = 'u8[65536]{0}', space=vmem, size = 0x10000, scoped, tag = 'input window, operand 6, single buffered']
    #allocation6 [shape = 's32[1]{0}', space=sflag, size = 0x4, scoped, tag = 'scoped memory for tpu_custom_call.1']
    #allocation7 [shape = 'u8[4096]{0}', space=vmem, size = 0x1000, scoped, tag = 'output window, operand 0, single buffered']
    #allocation8 [shape = 'u8[4096]{0}', space=vmem, size = 0x1000, scoped, tag = 'output window, operand 1, single buffered']
    #allocation9 [shape = 's32[1]{0}', space=sflag, size = 0x4, scoped, tag = 'scoped memory for tpu_custom_call.1']
    %15 = vsyncpa [#allocation3], 0
    %16 = vsyncpa [#allocation6], 0
    %17 = vsyncpa [#allocation4], 0
    %18 = vsyncpa [#allocation9], 0
    // Predicated region
    $region2: #{tpu_custom_call.1} parent=1 // pred_check
      _
    $region3: #{tpu_custom_call.1} parent=1 // pred_check_branch
      %20 = sbr.rel (0) target = $region5
    $region4: #{tpu_custom_call.1} parent=1 // pred_region
      _
    $region5: #{tpu_custom_call.1} parent=1 // pred_fallthru
      _
    // Predicated region
    $region6: #{tpu_custom_call.1} parent=1 // pred_check
      _
    $region7: #{tpu_custom_call.1} parent=1 // pred_check_branch
      %22 = sbr.rel (0) target = $region9
    $region8: #{tpu_custom_call.1} parent=1 // pred_region
      _
    $region9: #{tpu_custom_call.1} parent=1 // pred_fallthru
      _
    // Predicated region
    $region10: #{tpu_custom_call.1} parent=1 // pred_check
      _
    $region11: #{tpu_custom_call.1} parent=1 // pred_check_branch
      %24 = sbr.rel (0) target = $region13
    $region12: #{tpu_custom_call.1} parent=1 // pred_region
      _
    $region13: #{tpu_custom_call.1} parent=1 // pred_fallthru
      _
    // Predicated region
    $region14: #{tpu_custom_call.1} parent=1 // pred_check
      _
    $region15: #{tpu_custom_call.1} parent=1 // pred_check_branch
      %26 = sbr.rel (0) target = $region17
    $region16: #{tpu_custom_call.1} parent=1 // pred_region
      _
    $region17: #{tpu_custom_call.1} parent=1 // pred_fallthru
      _
    // Predicated region
    $region18: #{tpu_custom_call.1} parent=1 // pred_check
      _
    $region19: #{tpu_custom_call.1} parent=1 // pred_check_branch
      %28 = sbr.rel (0) target = $region21
    $region20: #{tpu_custom_call.1} parent=1 // pred_region
      %s30 = ssub.s32 2560, 2560
      %31 = vsyncadd [#allocation3], %s30
      %s32 = sshll.u32 [#allocation2], 4
      %s33 = int_to_ptr.vmem [resolvable:$true] %s32
      %38 = dma.hbm_to_vmem [thread:$0]  %s4, 2560, %s33, [#allocation3], 640, 640, 40
    $region21: #{tpu_custom_call.1} parent=1 // pred_fallthru
      _
    // Predicated region
    $region22: #{tpu_custom_call.1} parent=1 // pred_check
      _
    $region23: #{tpu_custom_call.1} parent=1 // pred_check_branch
      %40 = sbr.rel (0) target = $region25
    $region24: #{tpu_custom_call.1} parent=1 // pred_region
      _
    $region25: #{tpu_custom_call.1} parent=1 // pred_fallthru
      _
    // Predicated region
    $region26: #{tpu_custom_call.1} parent=1 // pred_check
      _
    $region27: #{tpu_custom_call.1} parent=1 // pred_check_branch
      %42 = sbr.rel (0) target = $region29
    $region28: #{tpu_custom_call.1} parent=1 // pred_region
      %s44 = ssub.s32 2048, 2048
      %45 = vsyncadd [#allocation6], %s44
      %s46 = sshll.u32 [#allocation5], 4
      %s47 = int_to_ptr.vmem [resolvable:$true] %s46
      %52 = dma.hbm_to_vmem [thread:$0]  %s6, 2048, %s47, [#allocation6], 128, 128, 8
    $region29: #{tpu_custom_call.1} parent=1 // pred_fallthru
      _
    // Predicated region
    $region30: #{tpu_custom_call.1} parent=1 // pred_check
      _
    $region31: #{tpu_custom_call.1} parent=1 // pred_check_branch
      %54 = sbr.rel (0) target = $region33
    $region32: #{tpu_custom_call.1} parent=1 // pred_region
      _
    $region33: #{tpu_custom_call.1} parent=1 // pred_fallthru
      _
    // Predicated region
    $region34: #{tpu_custom_call.1} parent=1 // pred_check
      _
    $region35: #{tpu_custom_call.1} parent=1 // pred_check_branch
      %56 = sbr.rel (0) target = $region37
    $region36: #{tpu_custom_call.1} parent=1 // pred_region
      %57 = dma.done [#allocation3], 2560
    $region37: #{tpu_custom_call.1} parent=1 // pred_fallthru
      _
    // Predicated region
    $region38: #{tpu_custom_call.1} parent=1 // pred_check
      _
    $region39: #{tpu_custom_call.1} parent=1 // pred_check_branch
      %59 = sbr.rel (0) target = $region41
    $region40: #{tpu_custom_call.1} parent=1 // pred_region
      %60 = dma.done [#allocation6], 2048
    $region41: #{tpu_custom_call.1} parent=1 // pred_fallthru
      _
    %v61 = vlaneseq
    %v62 = vand.u32 %v61, 127
    %v63 = vld [vmem:[%s0] sm:$0xff]
    %64 = vset.pattern.permute.xlu0 0
    %65 = vperm.xlu0 %64, %v63
    %v66 = vpop.permute.xlu0 %65
    %vm67 = vcmp.eq.s32.totalorder %v62, %v66
    %v68 = vsel %vm67, 1.0, 0.0
    %v69 = vld [vmem:[%s2] sm:$0xff]
    %v70 = vld [vmem:[%s2 + $0x8] sm:$0xff]
    %v71 = vld [vmem:[%s2 + $0x10] sm:$0xff]
    %v72 = vld [vmem:[%s2 + $0x18] sm:$0xff]
    %v73 = vld [vmem:[%s2 + $0x20] sm:$0xff]
    %v74 = vld [vmem:[%s2 + $0x28] sm:$0xff]
    %v75 = vld [vmem:[%s2 + $0x30] sm:$0xff]
    %v76 = vld [vmem:[%s2 + $0x38] sm:$0xff]
    %v77 = vld [vmem:[%s2 + $0x40] sm:$0xff]
    %v78 = vld [vmem:[%s2 + $0x48] sm:$0xff]
    %v79 = vld [vmem:[%s2 + $0x50] sm:$0xff]
    %v80 = vld [vmem:[%s2 + $0x58] sm:$0xff]
    %v81 = vld [vmem:[%s2 + $0x60] sm:$0xff]
    %v82 = vld [vmem:[%s2 + $0x68] sm:$0xff]
    %v83 = vld [vmem:[%s2 + $0x70] sm:$0xff]
    %v84 = vld [vmem:[%s2 + $0x78] sm:$0xff]
    %85 = vmatprep.subr.mxu0 0.0
    %86 = vmatpush1.msra.mxu0 %v84
    %87 = vmatprep.subr.mxu0 0.0
    %88 = vmatpush1.msra.mxu0 %v83
    %89 = vmatprep.subr.mxu0 0.0
    %90 = vmatpush1.msra.mxu0 %v82
    %91 = vmatprep.subr.mxu0 0.0
    %92 = vmatpush1.msra.mxu0 %v81
    %93 = vmatprep.subr.mxu0 0.0
    %94 = vmatpush1.msra.mxu0 %v80
    %95 = vmatprep.subr.mxu0 0.0
    %96 = vmatpush1.msra.mxu0 %v79
    %97 = vmatprep.subr.mxu0 0.0
    %98 = vmatpush1.msra.mxu0 %v78
    %99 = vmatprep.subr.mxu0 0.0
    %100 = vmatpush1.msra.mxu0 %v77
    %101 = vmatprep.subr.mxu0 0.0
    %102 = vmatpush1.msra.mxu0 %v76
    %103 = vmatprep.subr.mxu0 0.0
    %104 = vmatpush1.msra.mxu0 %v75
    %105 = vmatprep.subr.mxu0 0.0
    %106 = vmatpush1.msra.mxu0 %v74
    %107 = vmatprep.subr.mxu0 0.0
    %108 = vmatpush1.msra.mxu0 %v73
    %109 = vmatprep.subr.mxu0 0.0
    %110 = vmatpush1.msra.mxu0 %v72
    %111 = vmatprep.subr.mxu0 0.0
    %112 = vmatpush1.msra.mxu0 %v71
    %113 = vmatprep.subr.mxu0 0.0
    %114 = vmatpush1.msra.mxu0 %v70
    %115 = vmatprep.subr.mxu0 0.0
    %116 = vmatpush1.msra.mxu0 %v69
    %117 = vmatprep.subr.mxu0 0.0
    %118 = vmatpush2.msra.mxu0 0.0
    %119 = vmatprep.subr.mxu0 0.0
    %120 = vmatpush2.msra.mxu0 0.0
    %121 = vmatprep.subr.mxu0 0.0
    %122 = vmatpush2.msra.mxu0 0.0
    %123 = vmatprep.subr.mxu0 0.0
    %124 = vmatpush2.msra.mxu0 0.0
    %125 = vmatprep.subr.mxu0 0.0
    %126 = vmatpush2.msra.mxu0 0.0
    %127 = vmatprep.subr.mxu0 0.0
    %128 = vmatpush2.msra.mxu0 0.0
    %129 = vmatprep.subr.mxu0 0.0
    %130 = vmatpush2.msra.mxu0 0.0
    %131 = vmatprep.subr.mxu0 0.0
    %132 = vmatpush2.msra.mxu0 0.0
    %133 = vmatprep.subr.mxu0 0.0
    %134 = vmatpush2.msra.mxu0 0.0
    %135 = vmatprep.subr.mxu0 0.0
    %136 = vmatpush2.msra.mxu0 0.0
    %137 = vmatprep.subr.mxu0 0.0
    %138 = vmatpush2.msra.mxu0 0.0
    %139 = vmatprep.subr.mxu0 0.0
    %140 = vmatpush2.msra.mxu0 0.0
    %141 = vmatprep.subr.mxu0 0.0
    %142 = vmatpush2.msra.mxu0 0.0
    %143 = vmatprep.subr.mxu0 0.0
    %144 = vmatpush2.msra.mxu0 0.0
    %145 = vmatprep.subr.mxu0 0.0
    %146 = vmatpush2.msra.mxu0 0.0
    %147 = vmatprep.subr.mxu0 0.0
    %148 = vmatpush2.msra.mxu0 0.0
    %149 = vmatprep.mubr.f32.mxu0 0.0
    %150 = vmatmul.mubr.f32.gmra.mxu0 %v68
    %v151 = vpop.f32.mrf.mxu0
    %v152 = vadd.f32 0.0, %v151
    %v153 = vpop.f32.mrf.mxu0
    %154 = vdwg.mxu0
    %v155 = vmax.f32 %v152, 0.0
    %v156 = vld [vmem:[%s1] sm:$0xff]
    %v157 = vld [vmem:[%s3] sm:$0xff]
    %v158 = vld [vmem:[%s3 + $0x8] sm:$0xff]
    %v159 = vld [vmem:[%s3 + $0x10] sm:$0xff]
    %v160 = vld [vmem:[%s3 + $0x18] sm:$0xff]
    %v161 = vld [vmem:[%s3 + $0x20] sm:$0xff]
    %v162 = vld [vmem:[%s3 + $0x28] sm:$0xff]
    %v163 = vld [vmem:[%s3 + $0x30] sm:$0xff]
    %v164 = vld [vmem:[%s3 + $0x38] sm:$0xff]
    %v165 = vld [vmem:[%s3 + $0x40] sm:$0xff]
    %v166 = vld [vmem:[%s3 + $0x48] sm:$0xff]
    %v167 = vld [vmem:[%s3 + $0x50] sm:$0xff]
    %v168 = vld [vmem:[%s3 + $0x58] sm:$0xff]
    %v169 = vld [vmem:[%s3 + $0x60] sm:$0xff]
    %v170 = vld [vmem:[%s3 + $0x68] sm:$0xff]
    %v171 = vld [vmem:[%s3 + $0x70] sm:$0xff]
    %v172 = vld [vmem:[%s3 + $0x78] sm:$0xff]
    %v173 = vld [vmem:[%s3 + $0x80] sm:$0xff]
    %v174 = vld [vmem:[%s3 + $0x88] sm:$0xff]
    %v175 = vld [vmem:[%s3 + $0x90] sm:$0xff]
    %v176 = vld [vmem:[%s3 + $0x98] sm:$0xff]
    %v177 = vld [vmem:[#allocation2] sm:$0xff]
    %v178 = vld [vmem:[#allocation2 + $0x8] sm:$0xff]
    %v179 = vld [vmem:[#allocation2 + $0x10] sm:$0xff]
    %v180 = vld [vmem:[#allocation2 + $0x18] sm:$0xff]
    %v181 = vld [vmem:[#allocation2 + $0x20] sm:$0xff]
    %v182 = vld [vmem:[#allocation2 + $0x28] sm:$0xff]
    %v183 = vld [vmem:[#allocation2 + $0x30] sm:$0xff]
    %v184 = vld [vmem:[#allocation2 + $0x38] sm:$0xff]
    %v185 = vld [vmem:[#allocation2 + $0x40] sm:$0xff]
    %v186 = vld [vmem:[#allocation2 + $0x48] sm:$0xff]
    %v187 = vld [vmem:[#allocation2 + $0x50] sm:$0xff]
    %v188 = vld [vmem:[#allocation2 + $0x58] sm:$0xff]
    %v189 = vld [vmem:[#allocation2 + $0x60] sm:$0xff]
    %v190 = vld [vmem:[#allocation2 + $0x68] sm:$0xff]
    %v191 = vld [vmem:[#allocation2 + $0x70] sm:$0xff]
    %v192 = vld [vmem:[#allocation2 + $0x78] sm:$0xff]
    %v193 = vld [vmem:[#allocation2 + $0x80] sm:$0xff]
    %v194 = vld [vmem:[#allocation2 + $0x88] sm:$0xff]
    %v195 = vld [vmem:[#allocation2 + $0x90] sm:$0xff]
    %v196 = vld [vmem:[#allocation2 + $0x98] sm:$0xff]
    %vm197 = vcmask 261120
    %v199 = vsel %vm197, %v156, 0
    %201 = vmatprep.subr.mxu0 0.0
    %202 = vmatpush1.msra.mxu0 0.0
    %203 = vmatprep.subr.mxu0 0.0
    %204 = vmatpush1.msra.mxu0 0.0
    %205 = vmatprep.subr.mxu0 0.0
    %206 = vmatpush1.msra.mxu0 0.0
    %207 = vmatprep.subr.mxu0 0.0
    %208 = vmatpush1.msra.mxu0 0.0
    %209 = vmatprep.subr.mxu0 0.0
    %210 = vmatpush1.msra.mxu0 0.0
    %211 = vmatprep.subr.mxu0 0.0
    %212 = vmatpush1.msra.mxu0 0.0
    %213 = vmatprep.subr.mxu0 0.0
    %214 = vmatpush1.msra.mxu0 0.0
    %215 = vmatprep.subr.mxu0 0.0
    %216 = vmatpush1.msra.mxu0 0.0
    %217 = vmatprep.subr.mxu0 0.0
    %218 = vmatpush1.msra.mxu0 0.0
    %219 = vmatprep.subr.mxu0 0.0
    %220 = vmatpush1.msra.mxu0 0.0
    %221 = vmatprep.subr.mxu0 0.0
    %222 = vmatpush1.msra.mxu0 0.0
    %223 = vmatprep.subr.mxu0 0.0
    %224 = vmatpush1.msra.mxu0 0.0
    %225 = vmatprep.subr.mxu0 %v193
    %226 = vmatpush1.msra.mxu0 %v192
    %227 = vmatprep.subr.mxu0 %v188
    %228 = vmatpush1.msra.mxu0 %v187
    %229 = vmatprep.subr.mxu0 %v183
    %230 = vmatpush1.msra.mxu0 %v182
    %231 = vmatprep.subr.mxu0 %v178
    %232 = vmatpush1.msra.mxu0 %v177
    %233 = vmatprep.subr.mxu0 0.0
    %234 = vmatpush2.msra.mxu0 0.0
    %235 = vmatprep.subr.mxu0 0.0
    %236 = vmatpush2.msra.mxu0 0.0
    %237 = vmatprep.subr.mxu0 0.0
    %238 = vmatpush2.msra.mxu0 0.0
    %239 = vmatprep.subr.mxu0 0.0
    %240 = vmatpush2.msra.mxu0 0.0
    %241 = vmatprep.subr.mxu0 0.0
    %242 = vmatpush2.msra.mxu0 0.0
    %243 = vmatprep.subr.mxu0 0.0
    %244 = vmatpush2.msra.mxu0 0.0
    %245 = vmatprep.subr.mxu0 0.0
    %246 = vmatpush2.msra.mxu0 0.0
    %247 = vmatprep.subr.mxu0 0.0
    %248 = vmatpush2.msra.mxu0 0.0
    %249 = vmatprep.subr.mxu0 0.0
    %250 = vmatpush2.msra.mxu0 0.0
    %251 = vmatprep.subr.mxu0 0.0
    %252 = vmatpush2.msra.mxu0 0.0
    %253 = vmatprep.subr.mxu0 0.0
    %254 = vmatpush2.msra.mxu0 0.0
    %255 = vmatprep.subr.mxu0 0.0
    %256 = vmatpush2.msra.mxu0 0.0
    %257 = vmatprep.subr.mxu0 0.0
    %258 = vmatpush2.msra.mxu0 0.0
    %259 = vmatprep.subr.mxu0 0.0
    %260 = vmatpush2.msra.mxu0 0.0
    %261 = vmatprep.subr.mxu0 0.0
    %262 = vmatpush2.msra.mxu0 0.0
    %263 = vmatprep.subr.mxu0 0.0
    %264 = vmatpush2.msra.mxu0 0.0
    %265 = vmatprep.mubr.f32.mxu0 0.0
    %266 = vmatmul.mubr.f32.gmra.mxu0 %v199
    %v267 = vpop.f32.mrf.mxu0
    %v268 = vadd.f32 0.0, %v267
    %v269 = vpop.f32.mrf.mxu0
    %v270 = vadd.f32 0.0, %v269
    %271 = vdwg.mxu0
    %272 = vmatprep.subr.mxu0 0.0
    %273 = vmatpush1.msra.mxu0 0.0
    %274 = vmatprep.subr.mxu0 0.0
    %275 = vmatpush1.msra.mxu0 0.0
    %276 = vmatprep.subr.mxu0 0.0
    %277 = vmatpush1.msra.mxu0 0.0
    %278 = vmatprep.subr.mxu0 0.0
    %279 = vmatpush1.msra.mxu0 0.0
    %280 = vmatprep.subr.mxu0 0.0
    %281 = vmatpush1.msra.mxu0 0.0
    %282 = vmatprep.subr.mxu0 0.0
    %283 = vmatpush1.msra.mxu0 0.0
    %284 = vmatprep.subr.mxu0 0.0
    %285 = vmatpush1.msra.mxu0 0.0
    %286 = vmatprep.subr.mxu0 0.0
    %287 = vmatpush1.msra.mxu0 0.0
    %288 = vmatprep.subr.mxu0 0.0
    %289 = vmatpush1.msra.mxu0 0.0
    %290 = vmatprep.subr.mxu0 0.0
    %291 = vmatpush1.msra.mxu0 0.0
    %292 = vmatprep.subr.mxu0 0.0
    %293 = vmatpush1.msra.mxu0 0.0
    %294 = vmatprep.subr.mxu0 0.0
    %295 = vmatpush1.msra.mxu0 0.0
    %296 = vmatprep.subr.mxu0 %v195
    %297 = vmatpush1.msra.mxu0 %v194
    %298 = vmatprep.subr.mxu0 %v190
    %299 = vmatpush1.msra.mxu0 %v189
    %300 = vmatprep.subr.mxu0 %v185
    %301 = vmatpush1.msra.mxu0 %v184
    %302 = vmatprep.subr.mxu0 %v180
    %303 = vmatpush1.msra.mxu0 %v179
    %304 = vmatprep.subr.mxu0 0.0
    %305 = vmatpush2.msra.mxu0 0.0
    %306 = vmatprep.subr.mxu0 0.0
    %307 = vmatpush2.msra.mxu0 0.0
    %308 = vmatprep.subr.mxu0 0.0
    %309 = vmatpush2.msra.mxu0 0.0
    %310 = vmatprep.subr.mxu0 0.0
    %311 = vmatpush2.msra.mxu0 0.0
    %312 = vmatprep.subr.mxu0 0.0
    %313 = vmatpush2.msra.mxu0 0.0
    %314 = vmatprep.subr.mxu0 0.0
    %315 = vmatpush2.msra.mxu0 0.0
    %316 = vmatprep.subr.mxu0 0.0
    %317 = vmatpush2.msra.mxu0 0.0
    %318 = vmatprep.subr.mxu0 0.0
    %319 = vmatpush2.msra.mxu0 0.0
    %320 = vmatprep.subr.mxu0 0.0
    %321 = vmatpush2.msra.mxu0 0.0
    %322 = vmatprep.subr.mxu0 0.0
    %323 = vmatpush2.msra.mxu0 0.0
    %324 = vmatprep.subr.mxu0 0.0
    %325 = vmatpush2.msra.mxu0 0.0
    %326 = vmatprep.subr.mxu0 0.0
    %327 = vmatpush2.msra.mxu0 0.0
    %328 = vmatprep.subr.mxu0 0.0
    %329 = vmatpush2.msra.mxu0 0.0
    %330 = vmatprep.subr.mxu0 0.0
    %331 = vmatpush2.msra.mxu0 0.0
    %332 = vmatprep.subr.mxu0 0.0
    %333 = vmatpush2.msra.mxu0 0.0
    %334 = vmatprep.subr.mxu0 0.0
    %335 = vmatpush2.msra.mxu0 0.0
    %336 = vmatprep.mubr.f32.mxu0 0.0
    %337 = vmatmul.mubr.f32.gmra.mxu0 %v199
    %v338 = vpop.f32.mrf.mxu0
    %v339 = vadd.f32 0.0, %v338
    %v340 = vpop.f32.mrf.mxu0
    %v341 = vadd.f32 0.0, %v340
    %342 = vdwg.mxu0
    %343 = vmatprep.subr.mxu0 0.0
    %344 = vmatpush1.msra.mxu0 0.0
    %345 = vmatprep.subr.mxu0 0.0
    %346 = vmatpush1.msra.mxu0 0.0
    %347 = vmatprep.subr.mxu0 0.0
    %348 = vmatpush1.msra.mxu0 0.0
    %349 = vmatprep.subr.mxu0 0.0
    %350 = vmatpush1.msra.mxu0 0.0
    %351 = vmatprep.subr.mxu0 0.0
    %352 = vmatpush1.msra.mxu0 0.0
    %353 = vmatprep.subr.mxu0 0.0
    %354 = vmatpush1.msra.mxu0 0.0
    %355 = vmatprep.subr.mxu0 0.0
    %356 = vmatpush1.msra.mxu0 0.0
    %357 = vmatprep.subr.mxu0 0.0
    %358 = vmatpush1.msra.mxu0 0.0
    %359 = vmatprep.subr.mxu0 0.0
    %360 = vmatpush1.msra.mxu0 0.0
    %361 = vmatprep.subr.mxu0 0.0
    %362 = vmatpush1.msra.mxu0 0.0
    %363 = vmatprep.subr.mxu0 0.0
    %364 = vmatpush1.msra.mxu0 0.0
    %365 = vmatprep.subr.mxu0 0.0
    %366 = vmatpush1.msra.mxu0 0.0
    %367 = vmatprep.subr.mxu0 0.0
    %368 = vmatpush1.msra.mxu0 %v196
    %369 = vmatprep.subr.mxu0 0.0
    %370 = vmatpush1.msra.mxu0 %v191
    %371 = vmatprep.subr.mxu0 0.0
    %372 = vmatpush1.msra.mxu0 %v186
    %373 = vmatprep.subr.mxu0 0.0
    %374 = vmatpush1.msra.mxu0 %v181
    %375 = vmatprep.subr.mxu0 0.0
    %376 = vmatpush2.msra.mxu0 0.0
    %377 = vmatprep.subr.mxu0 0.0
    %378 = vmatpush2.msra.mxu0 0.0
    %379 = vmatprep.subr.mxu0 0.0
    %380 = vmatpush2.msra.mxu0 0.0
    %381 = vmatprep.subr.mxu0 0.0
    %382 = vmatpush2.msra.mxu0 0.0
    %383 = vmatprep.subr.mxu0 0.0
    %384 = vmatpush2.msra.mxu0 0.0
    %385 = vmatprep.subr.mxu0 0.0
    %386 = vmatpush2.msra.mxu0 0.0
    %387 = vmatprep.subr.mxu0 0.0
    %388 = vmatpush2.msra.mxu0 0.0
    %389 = vmatprep.subr.mxu0 0.0
    %390 = vmatpush2.msra.mxu0 0.0
    %391 = vmatprep.subr.mxu0 0.0
    %392 = vmatpush2.msra.mxu0 0.0
    %393 = vmatprep.subr.mxu0 0.0
    %394 = vmatpush2.msra.mxu0 0.0
    %395 = vmatprep.subr.mxu0 0.0
    %396 = vmatpush2.msra.mxu0 0.0
    %397 = vmatprep.subr.mxu0 0.0
    %398 = vmatpush2.msra.mxu0 0.0
    %399 = vmatprep.subr.mxu0 0.0
    %400 = vmatpush2.msra.mxu0 0.0
    %401 = vmatprep.subr.mxu0 0.0
    %402 = vmatpush2.msra.mxu0 0.0
    %403 = vmatprep.subr.mxu0 0.0
    %404 = vmatpush2.msra.mxu0 0.0
    %405 = vmatprep.subr.mxu0 0.0
    %406 = vmatpush2.msra.mxu0 0.0
    %407 = vmatprep.mubr.f32.mxu0 0.0
    %408 = vmatmul.mubr.f32.gmra.mxu0 %v199
    %v409 = vpop.f32.mrf.mxu0
    %v410 = vadd.f32 0.0, %v409
    %v411 = vpop.f32.mrf.mxu0
    %412 = vdwg.mxu0
    %v414 = vsel %vm197, %v155, 0
    %416 = vmatprep.subr.mxu0 0.0
    %417 = vmatpush1.msra.mxu0 0.0
    %418 = vmatprep.subr.mxu0 0.0
    %419 = vmatpush1.msra.mxu0 0.0
    %420 = vmatprep.subr.mxu0 0.0
    %421 = vmatpush1.msra.mxu0 0.0
    %422 = vmatprep.subr.mxu0 0.0
    %423 = vmatpush1.msra.mxu0 0.0
    %424 = vmatprep.subr.mxu0 0.0
    %425 = vmatpush1.msra.mxu0 0.0
    %426 = vmatprep.subr.mxu0 0.0
    %427 = vmatpush1.msra.mxu0 0.0
    %428 = vmatprep.subr.mxu0 0.0
    %429 = vmatpush1.msra.mxu0 0.0
    %430 = vmatprep.subr.mxu0 0.0
    %431 = vmatpush1.msra.mxu0 0.0
    %432 = vmatprep.subr.mxu0 0.0
    %433 = vmatpush1.msra.mxu0 0.0
    %434 = vmatprep.subr.mxu0 0.0
    %435 = vmatpush1.msra.mxu0 0.0
    %436 = vmatprep.subr.mxu0 0.0
    %437 = vmatpush1.msra.mxu0 0.0
    %438 = vmatprep.subr.mxu0 0.0
    %439 = vmatpush1.msra.mxu0 0.0
    %440 = vmatprep.subr.mxu0 %v173
    %441 = vmatpush1.msra.mxu0 %v172
    %442 = vmatprep.subr.mxu0 %v168
    %443 = vmatpush1.msra.mxu0 %v167
    %444 = vmatprep.subr.mxu0 %v163
    %445 = vmatpush1.msra.mxu0 %v162
    %446 = vmatprep.subr.mxu0 %v158
    %447 = vmatpush1.msra.mxu0 %v157
    %448 = vmatprep.subr.mxu0 0.0
    %449 = vmatpush2.msra.mxu0 0.0
    %450 = vmatprep.subr.mxu0 0.0
    %451 = vmatpush2.msra.mxu0 0.0
    %452 = vmatprep.subr.mxu0 0.0
    %453 = vmatpush2.msra.mxu0 0.0
    %454 = vmatprep.subr.mxu0 0.0
    %455 = vmatpush2.msra.mxu0 0.0
    %456 = vmatprep.subr.mxu0 0.0
    %457 = vmatpush2.msra.mxu0 0.0
    %458 = vmatprep.subr.mxu0 0.0
    %459 = vmatpush2.msra.mxu0 0.0
    %460 = vmatprep.subr.mxu0 0.0
    %461 = vmatpush2.msra.mxu0 0.0
    %462 = vmatprep.subr.mxu0 0.0
    %463 = vmatpush2.msra.mxu0 0.0
    %464 = vmatprep.subr.mxu0 0.0
    %465 = vmatpush2.msra.mxu0 0.0
    %466 = vmatprep.subr.mxu0 0.0
    %467 = vmatpush2.msra.mxu0 0.0
    %468 = vmatprep.subr.mxu0 0.0
    %469 = vmatpush2.msra.mxu0 0.0
    %470 = vmatprep.subr.mxu0 0.0
    %471 = vmatpush2.msra.mxu0 0.0
    %472 = vmatprep.subr.mxu0 0.0
    %473 = vmatpush2.msra.mxu0 0.0
    %474 = vmatprep.subr.mxu0 0.0
    %475 = vmatpush2.msra.mxu0 0.0
    %476 = vmatprep.subr.mxu0 0.0
    %477 = vmatpush2.msra.mxu0 0.0
    %478 = vmatprep.subr.mxu0 0.0
    %479 = vmatpush2.msra.mxu0 0.0
    %480 = vmatprep.mubr.f32.mxu0 0.0
    %481 = vmatmul.mubr.f32.gmra.mxu0 %v414
    %v482 = vpop.f32.mrf.mxu0
    %v483 = vadd.f32 %v268, %v482
    %v484 = vpop.f32.mrf.mxu0
    %v485 = vadd.f32 %v270, %v484
    %486 = vdwg.mxu0
    %487 = vmatprep.subr.mxu0 0.0
    %488 = vmatpush1.msra.mxu0 0.0
    %489 = vmatprep.subr.mxu0 0.0
    %490 = vmatpush1.msra.mxu0 0.0
    %491 = vmatprep.subr.mxu0 0.0
    %492 = vmatpush1.msra.mxu0 0.0
    %493 = vmatprep.subr.mxu0 0.0
    %494 = vmatpush1.msra.mxu0 0.0
    %495 = vmatprep.subr.mxu0 0.0
    %496 = vmatpush1.msra.mxu0 0.0
    %497 = vmatprep.subr.mxu0 0.0
    %498 = vmatpush1.msra.mxu0 0.0
    %499 = vmatprep.subr.mxu0 0.0
    %500 = vmatpush1.msra.mxu0 0.0
    %501 = vmatprep.subr.mxu0 0.0
    %502 = vmatpush1.msra.mxu0 0.0
    %503 = vmatprep.subr.mxu0 0.0
    %504 = vmatpush1.msra.mxu0 0.0
    %505 = vmatprep.subr.mxu0 0.0
    %506 = vmatpush1.msra.mxu0 0.0
    %507 = vmatprep.subr.mxu0 0.0
    %508 = vmatpush1.msra.mxu0 0.0
    %509 = vmatprep.subr.mxu0 0.0
    %510 = vmatpush1.msra.mxu0 0.0
    %511 = vmatprep.subr.mxu0 %v175
    %512 = vmatpush1.msra.mxu0 %v174
    %513 = vmatprep.subr.mxu0 %v170
    %514 = vmatpush1.msra.mxu0 %v169
    %515 = vmatprep.subr.mxu0 %v165
    %516 = vmatpush1.msra.mxu0 %v164
    %517 = vmatprep.subr.mxu0 %v160
    %518 = vmatpush1.msra.mxu0 %v159
    %519 = vmatprep.subr.mxu0 0.0
    %520 = vmatpush2.msra.mxu0 0.0
    %521 = vmatprep.subr.mxu0 0.0
    %522 = vmatpush2.msra.mxu0 0.0
    %523 = vmatprep.subr.mxu0 0.0
    %524 = vmatpush2.msra.mxu0 0.0
    %525 = vmatprep.subr.mxu0 0.0
    %526 = vmatpush2.msra.mxu0 0.0
    %527 = vmatprep.subr.mxu0 0.0
    %528 = vmatpush2.msra.mxu0 0.0
    %529 = vmatprep.subr.mxu0 0.0
    %530 = vmatpush2.msra.mxu0 0.0
    %531 = vmatprep.subr.mxu0 0.0
    %532 = vmatpush2.msra.mxu0 0.0
    %533 = vmatprep.subr.mxu0 0.0
    %534 = vmatpush2.msra.mxu0 0.0
    %535 = vmatprep.subr.mxu0 0.0
    %536 = vmatpush2.msra.mxu0 0.0
    %537 = vmatprep.subr.mxu0 0.0
    %538 = vmatpush2.msra.mxu0 0.0
    %539 = vmatprep.subr.mxu0 0.0
    %540 = vmatpush2.msra.mxu0 0.0
    %541 = vmatprep.subr.mxu0 0.0
    %542 = vmatpush2.msra.mxu0 0.0
    %543 = vmatprep.subr.mxu0 0.0
    %544 = vmatpush2.msra.mxu0 0.0
    %545 = vmatprep.subr.mxu0 0.0
    %546 = vmatpush2.msra.mxu0 0.0
    %547 = vmatprep.subr.mxu0 0.0
    %548 = vmatpush2.msra.mxu0 0.0
    %549 = vmatprep.subr.mxu0 0.0
    %550 = vmatpush2.msra.mxu0 0.0
    %551 = vmatprep.mubr.f32.mxu0 0.0
    %552 = vmatmul.mubr.f32.gmra.mxu0 %v414
    %v553 = vpop.f32.mrf.mxu0
    %v554 = vadd.f32 %v339, %v553
    %v555 = vpop.f32.mrf.mxu0
    %v556 = vadd.f32 %v341, %v555
    %557 = vdwg.mxu0
    %558 = vmatprep.subr.mxu0 0.0
    %559 = vmatpush1.msra.mxu0 0.0
    %560 = vmatprep.subr.mxu0 0.0
    %561 = vmatpush1.msra.mxu0 0.0
    %562 = vmatprep.subr.mxu0 0.0
    %563 = vmatpush1.msra.mxu0 0.0
    %564 = vmatprep.subr.mxu0 0.0
    %565 = vmatpush1.msra.mxu0 0.0
    %566 = vmatprep.subr.mxu0 0.0
    %567 = vmatpush1.msra.mxu0 0.0
    %568 = vmatprep.subr.mxu0 0.0
    %569 = vmatpush1.msra.mxu0 0.0
    %570 = vmatprep.subr.mxu0 0.0
    %571 = vmatpush1.msra.mxu0 0.0
    %572 = vmatprep.subr.mxu0 0.0
    %573 = vmatpush1.msra.mxu0 0.0
    %574 = vmatprep.subr.mxu0 0.0
    %575 = vmatpush1.msra.mxu0 0.0
    %576 = vmatprep.subr.mxu0 0.0
    %577 = vmatpush1.msra.mxu0 0.0
    %578 = vmatprep.subr.mxu0 0.0
    %579 = vmatpush1.msra.mxu0 0.0
    %580 = vmatprep.subr.mxu0 0.0
    %581 = vmatpush1.msra.mxu0 0.0
    %582 = vmatprep.subr.mxu0 0.0
    %583 = vmatpush1.msra.mxu0 %v176
    %584 = vmatprep.subr.mxu0 0.0
    %585 = vmatpush1.msra.mxu0 %v171
    %586 = vmatprep.subr.mxu0 0.0
    %587 = vmatpush1.msra.mxu0 %v166
    %588 = vmatprep.subr.mxu0 0.0
    %589 = vmatpush1.msra.mxu0 %v161
    %590 = vmatprep.subr.mxu0 0.0
    %591 = vmatpush2.msra.mxu0 0.0
    %592 = vmatprep.subr.mxu0 0.0
    %593 = vmatpush2.msra.mxu0 0.0
    %594 = vmatprep.subr.mxu0 0.0
    %595 = vmatpush2.msra.mxu0 0.0
    %596 = vmatprep.subr.mxu0 0.0
    %597 = vmatpush2.msra.mxu0 0.0
    %598 = vmatprep.subr.mxu0 0.0
    %599 = vmatpush2.msra.mxu0 0.0
    %600 = vmatprep.subr.mxu0 0.0
    %601 = vmatpush2.msra.mxu0 0.0
    %602 = vmatprep.subr.mxu0 0.0
    %603 = vmatpush2.msra.mxu0 0.0
    %604 = vmatprep.subr.mxu0 0.0
    %605 = vmatpush2.msra.mxu0 0.0
    %606 = vmatprep.subr.mxu0 0.0
    %607 = vmatpush2.msra.mxu0 0.0
    %608 = vmatprep.subr.mxu0 0.0
    %609 = vmatpush2.msra.mxu0 0.0
    %610 = vmatprep.subr.mxu0 0.0
    %611 = vmatpush2.msra.mxu0 0.0
    %612 = vmatprep.subr.mxu0 0.0
    %613 = vmatpush2.msra.mxu0 0.0
    %614 = vmatprep.subr.mxu0 0.0
    %615 = vmatpush2.msra.mxu0 0.0
    %616 = vmatprep.subr.mxu0 0.0
    %617 = vmatpush2.msra.mxu0 0.0
    %618 = vmatprep.subr.mxu0 0.0
    %619 = vmatpush2.msra.mxu0 0.0
    %620 = vmatprep.subr.mxu0 0.0
    %621 = vmatpush2.msra.mxu0 0.0
    %622 = vmatprep.mubr.f32.mxu0 0.0
    %623 = vmatmul.mubr.f32.gmra.mxu0 %v414
    %v624 = vpop.f32.mrf.mxu0
    %v625 = vadd.f32 %v410, %v624
    %v626 = vpop.f32.mrf.mxu0
    %627 = vdwg.mxu0
    %v628 = vld [vmem:[%s5] sm:$0x1f]
    %v630 = vlaneseq
    %v631 = vshrl.u32 %v630, 7
    %v632 = vsub.s32 0, %v631
    %v633 = vrot.slane %v628, %v632
    %v634 = vlaneseq
    %v635 = vshrl.u32 %v634, 7
    %v636 = vsub.s32 1, %v635
    %v637 = vrot.slane %v628, %v636
    %v638 = vlaneseq
    %v639 = vshrl.u32 %v638, 7
    %v640 = vsub.s32 2, %v639
    %v641 = vrot.slane %v628, %v640
    %v642 = vlaneseq
    %v643 = vshrl.u32 %v642, 7
    %v644 = vsub.s32 3, %v643
    %v645 = vrot.slane %v628, %v644
    %v646 = vlaneseq
    %v647 = vshrl.u32 %v646, 7
    %v648 = vsub.s32 4, %v647
    %v649 = vrot.slane %v628, %v648
    %v655 = vadd.f32 %v483, %v633
    %v656 = vadd.f32 %v485, %v637
    %v657 = vadd.f32 %v554, %v641
    %v658 = vadd.f32 %v556, %v645
    %v659 = vadd.f32 %v625, %v649
    %v660 = vxor.u32 %v655, 2147483648
    %v661 = vmul.f32 %v660, 1.442695
    %v662 = vpow.pop %v661
    %v663 = vadd.f32 %v662, 1.0
    %v664 = vrcp.pop %v663
    %v665 = vmul.f32 1.0, %v664
    %v666 = vxor.u32 %v656, 2147483648
    %v667 = vmul.f32 %v666, 1.442695
    %v668 = vpow.pop %v667
    %v669 = vadd.f32 %v668, 1.0
    %v670 = vrcp.pop %v669
    %v671 = vmul.f32 1.0, %v670
    %v672 = vmul.f32 %v665, %v658
    %v673 = vadd.f32 %v657, %v672
    %v674 = vtanh.pop %v673
    %v675 = vsub.f32 1.0, %v671
    %v676 = vmul.f32 %v675, %v674
    %v677 = vmul.f32 %v671, %v659
    %v678 = vadd.f32 %v676, %v677
    %679 = vst [vmem:[#allocation8] sm:$0xff] %v678
    %v680 = vld [vmem:[#allocation5] sm:$0xff]
    %v681 = vld [vmem:[#allocation5 + $0x8] sm:$0xff]
    %v682 = vld [vmem:[#allocation5 + $0x10] sm:$0xff]
    %v683 = vld [vmem:[#allocation5 + $0x18] sm:$0xff]
    %v684 = vld [vmem:[#allocation5 + $0x20] sm:$0xff]
    %v685 = vld [vmem:[#allocation5 + $0x28] sm:$0xff]
    %v686 = vld [vmem:[#allocation5 + $0x30] sm:$0xff]
    %v687 = vld [vmem:[#allocation5 + $0x38] sm:$0xff]
    %v688 = vld [vmem:[#allocation5 + $0x40] sm:$0xff]
    %v689 = vld [vmem:[#allocation5 + $0x48] sm:$0xff]
    %v690 = vld [vmem:[#allocation5 + $0x50] sm:$0xff]
    %v691 = vld [vmem:[#allocation5 + $0x58] sm:$0xff]
    %v692 = vld [vmem:[#allocation5 + $0x60] sm:$0xff]
    %v693 = vld [vmem:[#allocation5 + $0x68] sm:$0xff]
    %v694 = vld [vmem:[#allocation5 + $0x70] sm:$0xff]
    %v695 = vld [vmem:[#allocation5 + $0x78] sm:$0xff]
    %v696 = vld [vmem:[%s7] sm:$0x1]
    %v698 = vlaneseq
    %v699 = vshrl.u32 %v698, 7
    %v700 = vsub.s32 0, %v699
    %v701 = vrot.slane %v696, %v700
    %703 = vmatprep.subr.mxu0 0.0
    %704 = vmatpush1.msra.mxu0 %v695
    %705 = vmatprep.subr.mxu0 0.0
    %706 = vmatpush1.msra.mxu0 %v694
    %707 = vmatprep.subr.mxu0 0.0
    %708 = vmatpush1.msra.mxu0 %v693
    %709 = vmatprep.subr.mxu0 0.0
    %710 = vmatpush1.msra.mxu0 %v692
    %711 = vmatprep.subr.mxu0 0.0
    %712 = vmatpush1.msra.mxu0 %v691
    %713 = vmatprep.subr.mxu0 0.0
    %714 = vmatpush1.msra.mxu0 %v690
    %715 = vmatprep.subr.mxu0 0.0
    %716 = vmatpush1.msra.mxu0 %v689
    %717 = vmatprep.subr.mxu0 0.0
    %718 = vmatpush1.msra.mxu0 %v688
    %719 = vmatprep.subr.mxu0 0.0
    %720 = vmatpush1.msra.mxu0 %v687
    %721 = vmatprep.subr.mxu0 0.0
    %722 = vmatpush1.msra.mxu0 %v686
    %723 = vmatprep.subr.mxu0 0.0
    %724 = vmatpush1.msra.mxu0 %v685
    %725 = vmatprep.subr.mxu0 0.0
    %726 = vmatpush1.msra.mxu0 %v684
    %727 = vmatprep.subr.mxu0 0.0
    %728 = vmatpush1.msra.mxu0 %v683
    %729 = vmatprep.subr.mxu0 0.0
    %730 = vmatpush1.msra.mxu0 %v682
    %731 = vmatprep.subr.mxu0 0.0
    %732 = vmatpush1.msra.mxu0 %v681
    %733 = vmatprep.subr.mxu0 0.0
    %734 = vmatpush1.msra.mxu0 %v680
    %735 = vmatprep.subr.mxu0 0.0
    %736 = vmatpush2.msra.mxu0 0.0
    %737 = vmatprep.subr.mxu0 0.0
    %738 = vmatpush2.msra.mxu0 0.0
    %739 = vmatprep.subr.mxu0 0.0
    %740 = vmatpush2.msra.mxu0 0.0
    %741 = vmatprep.subr.mxu0 0.0
    %742 = vmatpush2.msra.mxu0 0.0
    %743 = vmatprep.subr.mxu0 0.0
    %744 = vmatpush2.msra.mxu0 0.0
    %745 = vmatprep.subr.mxu0 0.0
    %746 = vmatpush2.msra.mxu0 0.0
    %747 = vmatprep.subr.mxu0 0.0
    %748 = vmatpush2.msra.mxu0 0.0
    %749 = vmatprep.subr.mxu0 0.0
    %750 = vmatpush2.msra.mxu0 0.0
    %751 = vmatprep.subr.mxu0 0.0
    %752 = vmatpush2.msra.mxu0 0.0
    %753 = vmatprep.subr.mxu0 0.0
    %754 = vmatpush2.msra.mxu0 0.0
    %755 = vmatprep.subr.mxu0 0.0
    %756 = vmatpush2.msra.mxu0 0.0
    %757 = vmatprep.subr.mxu0 0.0
    %758 = vmatpush2.msra.mxu0 0.0
    %759 = vmatprep.subr.mxu0 0.0
    %760 = vmatpush2.msra.mxu0 0.0
    %761 = vmatprep.subr.mxu0 0.0
    %762 = vmatpush2.msra.mxu0 0.0
    %763 = vmatprep.subr.mxu0 0.0
    %764 = vmatpush2.msra.mxu0 0.0
    %765 = vmatprep.subr.mxu0 0.0
    %766 = vmatpush2.msra.mxu0 0.0
    %767 = vmatprep.mubr.f32.mxu0 0.0
    %768 = vmatmul.mubr.f32.gmra.mxu0 %v678
    %v769 = vpop.f32.mrf.mxu0
    %v770 = vadd.f32 %v701, %v769
    %v771 = vpop.f32.mrf.mxu0
    %772 = vdwg.mxu0
    %773 = vmax.xlane.f32.xlu0 %v770
    %v774 = vpop.xlane.xlu0 %773
    %v775 = vsub.f32 %v770, %v774
    %v776 = vmul.f32 %v775, 1.442695
    %v777 = vpow.pop %v776
    %778 = vadd.xlane.f32.xlu0 %v777
    %v779 = vpop.xlane.xlu0 %778
    %v780 = vlog2.pop %v779
    %v781 = vmul.f32 %v780, 0.6931472
    %v782 = vsub.f32 %v775, %v781
    %783 = vst [vmem:[#allocation7] sm:$0xff] %v782
    // Predicated region
    $region42: #{tpu_custom_call.1} parent=1 // pred_check
      _
    $region43: #{tpu_custom_call.1} parent=1 // pred_check_branch
      %785 = sbr.rel (0) target = $region45
    $region44: #{tpu_custom_call.1} parent=1 // pred_region
      %s787 = ssub.s32 128, 128
      %788 = vsyncadd [#allocation4], %s787
      %s790 = sshll.u32 [#allocation7], 4
      %s791 = int_to_ptr.vmem [resolvable:$true] %s790
      %793 = dma.vmem_to_hbm [thread:$0]  %s791, 128, %s8, [#allocation4]
    $region45: #{tpu_custom_call.1} parent=1 // pred_fallthru
      _
    // Predicated region
    $region46: #{tpu_custom_call.1} parent=1 // pred_check
      _
    $region47: #{tpu_custom_call.1} parent=1 // pred_check_branch
      %795 = sbr.rel (0) target = $region49
    $region48: #{tpu_custom_call.1} parent=1 // pred_region
      %s797 = ssub.s32 128, 128
      %798 = vsyncadd [#allocation9], %s797
      %s800 = sshll.u32 [#allocation8], 4
      %s801 = int_to_ptr.vmem [resolvable:$true] %s800
      %803 = dma.vmem_to_hbm [thread:$0]  %s801, 128, %s9, [#allocation9]
    $region49: #{tpu_custom_call.1} parent=1 // pred_fallthru
      _
    // Predicated region
    $region50: #{tpu_custom_call.1} parent=1 // pred_check
      _
    $region51: #{tpu_custom_call.1} parent=1 // pred_check_branch
      %805 = sbr.rel (0) target = $region53
    $region52: #{tpu_custom_call.1} parent=1 // pred_region
      %806 = dma.done [#allocation4], 128
    $region53: #{tpu_custom_call.1} parent=1 // pred_fallthru
      _
    // Predicated region
    $region54: #{tpu_custom_call.1} parent=1 // pred_check
      _
    $region55: #{tpu_custom_call.1} parent=1 // pred_check_branch
      %808 = sbr.rel (0) target = $region57
    $region56: #{tpu_custom_call.1} parent=1 // pred_region
      %809 = dma.done [#allocation9], 128
    $region57: #{tpu_custom_call.1} parent=1 // pred_fallthru
      _
    %810 = vsyncpa [#allocation3], 1
    %811 = vsyncpa [#allocation6], 1
    %812 = vsyncpa [#allocation4], 1
    %813 = vsyncpa [#allocation9], 1

</llo_original>
